<compile_context>
chip_gen: v7x
topology: tpu7x:2x2x1
jax: 0.10.0
libtpu: 0.0.40
codegen_flags: <defaults>
</compile_context>

<pallas_src>
import functools

import jax
import jax.numpy as jnp
from jax.experimental import pallas as pl
from jax.experimental.pallas import tpu as pltpu

_MIB = 1024 * 1024


# --------------------------------------------------------------------------- #
# Kernel
# --------------------------------------------------------------------------- #
def _twist_head_kernel(h_ref, w1_ref, b1_ref, w2_ref, b2_ref,
                       w3_ref, b3_ref, w4_ref, b4_ref, o_ref, acc_ref,
                       *, inv_seq_len):
    s = pl.program_id(1)

    @pl.when(s == 0)
    def _():
        acc_ref[...] = jnp.zeros_like(acc_ref)

    # Per-step partial sum over the seq axis, accumulated in f32
    # (native-dtype HBM traffic; upcast happens per element in the add).
    acc_ref[...] += jnp.sum(h_ref[...], axis=1, dtype=jnp.float32)   # [TB, D]

    # Tiny 4-layer MLP + the single HBM output store: once per B-tile, on the
    # final reduction step only.
    @pl.when(s == pl.num_programs(1) - 1)
    def _():
        mp = acc_ref[...] * inv_seq_len                               # [TB, D]

        h1 = jnp.dot(mp, w1_ref[...],
                     preferred_element_type=jnp.float32) + b1_ref[...]
        h1 = jnp.maximum(h1, 0.0)

        h2 = jnp.dot(h1, w2_ref[...],
                     preferred_element_type=jnp.float32) + b2_ref[...]
        h2 = jnp.maximum(h2, 0.0)

        h3 = jnp.dot(h2, w3_ref[...],
                     preferred_element_type=jnp.float32) + b3_ref[...]
        h3 = jnp.maximum(h3, 0.0)

        out = jnp.dot(h3, w4_ref[...],
                      preferred_element_type=jnp.float32) + b4_ref[...]
        o_ref[...] = out.astype(o_ref.dtype)                          # [TB, 1]


# --------------------------------------------------------------------------- #
# Generation-aware VMEM budgeting & tile selection
# --------------------------------------------------------------------------- #
def _vmem_budget_bytes():
    """Physical VMEM of the current chip minus compiler headroom."""
    try:
        cap = int(pltpu.get_tpu_info().vmem_capacity_bytes)
    except Exception:
        cap = 64 * _MIB                     # v7x-safe conservative default
    # Headroom for Mosaic internal scratch / spills:
    #   v7x 64 MiB -> ~52 MiB usable; v5e/v6e 128 MiB -> ~112 MiB usable.
    return cap - max(12 * _MIB, cap // 8)


def _divisors_desc(n):
    return [d for d in range(n, 0, -1) if n % d == 0]


def _sublane_pack(itemsize):
    """Rows packed per sublane group: f32 -> 8, bf16 -> 16, int8/fp8 -> 32."""
    return max(8, 8 * (4 // max(1, int(itemsize))))


def _batch_tile_candidates(B, *, max_tb=128):
    """Legal batch tiles (TB % 8 == 0 or TB == B), preferring >= 2 grid points
    on the 'parallel' batch axis (keeps both v7x TensorCores busy)."""
    cands = [d for d in _divisors_desc(B)
             if (d % 8 == 0 or d == B) and d <= max_tb]
    if not cands:
        cands = [B]
    if B >= 16:
        split = [d for d in cands if d <= B // 2]        # >= 2 batch grid points
        rest = [d for d in cands if d > B // 2]
        if split:
            cands = split + rest
    return cands


def _seq_tile_candidates(S, sublane):
    """Legal seq tiles: dtype-aligned divisors first, then 8-aligned, then
    full-S (always layout-legal)."""
    divs = _divisors_desc(S)
    aligned = [d for d in divs if d % sublane == 0]
    base8 = [d for d in divs if d % 8 == 0 and d % sublane != 0]
    cands = aligned + base8
    if S not in cands:
        cands.append(S)
    return cands


def _pick_tiles(B, S, D, h_itemsize, usable_vmem, resident_bytes, *, ts_override=None):
    """Jointly pick (TB, TS): grow TS before TB; shrink TB (not a full-S
    fallback) when the double-buffered stream would not fit the VMEM budget."""
    sublane = _sublane_pack(h_itemsize)
    tb_cands = _batch_tile_candidates(B)
    ts_cands = ([ts_override] if ts_override is not None
                else _seq_tile_candidates(S, sublane))

    for tb in tb_cands:
        scratch_bytes = tb * D * 4 + tb * 4 * 2          # f32 acc + output buffers
        per_buf = (usable_vmem - resident_bytes - scratch_bytes) // 2
        if per_buf <= 0:
            continue
        for ts in ts_cands:
            if tb * ts * D * h_itemsize <= per_buf:
                return tb, ts
    # Last resort: smallest legal tiles; the compiler VMEM limit is the arbiter.
    return tb_cands[-1], ts_cands[-1]


# --------------------------------------------------------------------------- #
# Wrapper
# --------------------------------------------------------------------------- #
def twist_head_forward(particles, last_hidden_state, prefix_len, params, *, ts=None):
    """JAX wrapper for TwistHead.forward (main MLP branch).

    prefix_len must be a static Python int (branch selection is Python-level
    control flow, as in the original module).
    """
    t = particles.shape[0] - prefix_len
    if t == 0:
        return jnp.asarray(0.0, dtype=jnp.float32)
    # TODO(synk): t == self.T branch (self.phi.phi(particles)) depends on an
    # external phi model / undefined self.T and is not implemented.

    B, S, D = last_hidden_state.shape
    w1, b1, w2, b2, w3, b3, w4, b4 = params
    H = w1.shape[1]

    usable_vmem = _vmem_budget_bytes()
    # Weights/biases use constant index_maps (resident, no re-DMA) but still
    # occupy 2 pipeline buffers each -> subtract that from the stream budget.
    resident_bytes = sum(int(p.size) * p.dtype.itemsize for p in params) * 2

    h_itemsize = last_hidden_state.dtype.itemsize
    TB, TS = _pick_tiles(B, S, D, h_itemsize, usable_vmem, resident_bytes,
                         ts_override=ts)
    assert B % TB == 0 and S % TS == 0, (B, TB, S, TS)

    kernel = functools.partial(_twist_head_kernel, inv_seq_len=1.0 / S)

    out = pl.pallas_call(
        kernel,
        out_shape=jax.ShapeDtypeStruct((B, 1), jnp.float32),
        grid_spec=pltpu.PrefetchScalarGridSpec(
            num_scalar_prefetch=0,
            grid=(B // TB, S // TS),                      # reduction (seq) axis last
            in_specs=[
                # Streamed activation tiles: double-buffered over the seq axis.
                pl.BlockSpec((TB, TS, D), lambda b, s: (b, s, 0)),
                # Weights / biases: constant index_maps -> resident, no re-DMA.
                pl.BlockSpec((D, H), lambda b, s: (0, 0)),   # w1
                pl.BlockSpec((1, H), lambda b, s: (0, 0)),   # b1
                pl.BlockSpec((H, H), lambda b, s: (0, 0)),   # w2
                pl.BlockSpec((1, H), lambda b, s: (0, 0)),   # b2
                pl.BlockSpec((H, H), lambda b, s: (0, 0)),   # w3
                pl.BlockSpec((1, H), lambda b, s: (0, 0)),   # b3
                pl.BlockSpec((H, 1), lambda b, s: (0, 0)),   # w4
                pl.BlockSpec((1, 1), lambda b, s: (0, 0)),   # b4
            ],
            # Output block index constant along the seq axis -> written once
            # per B-tile (on the final reduction step).
            out_specs=pl.BlockSpec((TB, 1), lambda b, s: (b, 0)),
            scratch_shapes=[pltpu.VMEM((TB, D), jnp.float32)],  # f32 accumulator
        ),
        compiler_params=pltpu.CompilerParams(
            dimension_semantics=("parallel", "arbitrary"),
            vmem_limit_bytes=int(usable_vmem),
        ),
    )(last_hidden_state, w1, b1, w2, b2, w3, b3, w4, b4)
    return out


# --------------------------------------------------------------------------- #
# Params + reference
# --------------------------------------------------------------------------- #
def init_params(key, input_dim, h):
    """Deterministic parameter init. Weights stored as [in, out] (pre-transposed)."""
    ks = jax.random.split(key, 8)

    def lin(kw, kb, fan_in, fan_out):
        bound = 1.0 / jnp.sqrt(fan_in)
        w = jax.random.uniform(kw, (fan_in, fan_out), jnp.float32, -bound, bound)
        b = jax.random.uniform(kb, (1, fan_out), jnp.float32, -bound, bound)
        return w, b

    w1, b1 = lin(ks[0], ks[1], input_dim, h)
    w2, b2 = lin(ks[2], ks[3], h, h)
    w3, b3 = lin(ks[4], ks[5], h, h)
    w4, b4 = lin(ks[6], ks[7], h, 1)
    return (w1, b1, w2, b2, w3, b3, w4, b4)


def reference_forward(last_hidden_state, params):
    """Pure-JAX reference for verification."""
    w1, b1, w2, b2, w3, b3, w4, b4 = params
    mp = jnp.mean(last_hidden_state.astype(jnp.float32), axis=1)
    h1 = jnp.maximum(mp @ w1 + b1, 0.0)
    h2 = jnp.maximum(h1 @ w2 + b2, 0.0)
    h3 = jnp.maximum(h2 @ w3 + b3, 0.0)
    return h3 @ w4 + b4


if __name__ == "__main__":
    key = jax.random.PRNGKey(0)
    k_h, k_p, k_param = jax.random.split(key, 3)

    # Small shapes consistent with the module (input_dim -> D, h -> H).
    B, S, D, H = 2, 16, 32, 16
    seq_len, prefix_len = 10, 4          # t = 6 != 0  -> MLP branch

    last_hidden_state = jax.random.normal(k_h, (B, S, D), dtype=jnp.float32)
    particles = jax.random.randint(k_p, (seq_len, B), 0, 100)   # only shape[0] matters
    params = init_params(k_param, D, H)

    ref = reference_forward(last_hidden_state, params)

    # Auto-picked tiles (single seq step at this tiny S, budget-derived).
    out_auto = jax.block_until_ready(
        twist_head_forward(particles, last_hidden_state, prefix_len, params))
    # Explicit ts=8 exercises the multi-step seq-axis reduction pipeline.
    out_pipe = jax.block_until_ready(
        twist_head_forward(particles, last_hidden_state, prefix_len, params, ts=8))

    assert out_auto.shape == (B, 1), out_auto.shape
    assert jnp.allclose(out_auto, ref, atol=1e-5, rtol=1e-5), (out_auto, ref)
    assert jnp.allclose(out_pipe, ref, atol=1e-5, rtol=1e-5), (out_pipe, ref)

    print("KERNEL_OK")
</pallas_src>

<mosaic_0001>
module attributes {stable_mosaic.version = 11 : i64} {
  func.func @_twist_head_kernel(%arg0: i32, %arg1: i32, %arg2: memref<2x16x32xf32, #tpu.memory_space<vmem>>, %arg3: memref<32x16xf32, #tpu.memory_space<vmem>>, %arg4: memref<1x16xf32, #tpu.memory_space<vmem>>, %arg5: memref<16x16xf32, #tpu.memory_space<vmem>>, %arg6: memref<1x16xf32, #tpu.memory_space<vmem>>, %arg7: memref<16x16xf32, #tpu.memory_space<vmem>>, %arg8: memref<1x16xf32, #tpu.memory_space<vmem>>, %arg9: memref<16x1xf32, #tpu.memory_space<vmem>>, %arg10: memref<1x1xf32, #tpu.memory_space<vmem>>, %arg11: memref<2x1xf32, #tpu.memory_space<vmem>>, %arg12: memref<2x32xf32, #tpu.memory_space<vmem>>) attributes {dimension_semantics = [#tpu.dimension_semantics<parallel>, #tpu.dimension_semantics<arbitrary>], iteration_bounds = array<i64: 1, 1>, scalar_prefetch = 0 : i64, scratch_operands = 1 : i64, tpu.core_type = #tpu.core_type<tc>, window_params = [{transform_indices = @transform_0, window_bounds = array<i64: 2, 16, 32>}, {pipeline_mode = #tpu.pipeline_mode<synchronous>, transform_indices = @transform_1, window_bounds = array<i64: 32, 16>}, {pipeline_mode = #tpu.pipeline_mode<synchronous>, transform_indices = @transform_2, window_bounds = array<i64: 1, 16>}, {pipeline_mode = #tpu.pipeline_mode<synchronous>, transform_indices = @transform_3, window_bounds = array<i64: 16, 16>}, {pipeline_mode = #tpu.pipeline_mode<synchronous>, transform_indices = @transform_4, window_bounds = array<i64: 1, 16>}, {pipeline_mode = #tpu.pipeline_mode<synchronous>, transform_indices = @transform_5, window_bounds = array<i64: 16, 16>}, {pipeline_mode = #tpu.pipeline_mode<synchronous>, transform_indices = @transform_6, window_bounds = array<i64: 1, 16>}, {pipeline_mode = #tpu.pipeline_mode<synchronous>, transform_indices = @transform_7, window_bounds = array<i64: 16, 1>}, {pipeline_mode = #tpu.pipeline_mode<synchronous>, transform_indices = @transform_8, window_bounds = array<i64: 1, 1>}, {transform_indices = @transform_9, window_bounds = array<i64: 2, 1>}]} {
    %c0_i32 = arith.constant 0 : i32
    %0 = arith.cmpi eq, %arg1, %c0_i32 : i32
    %1 = arith.extui %0 : i1 to i32
    %c0_i32_0 = arith.constant 0 : i32
    %2 = arith.cmpi ne, %1, %c0_i32_0 : i32
    scf.if %2 {
      %cst_9 = arith.constant 0.000000e+00 : f32
      %11 = vector.broadcast %cst_9 : f32 to vector<2x32xf32>
      %c0_10 = arith.constant 0 : index
      %c0_11 = arith.constant 0 : index
      %12 = vector.load %arg12[%c0_10, %c0_11] : memref<2x32xf32, #tpu.memory_space<vmem>>, vector<2x32xf32>
      tpu.vector_store %arg12[%c0_10, %c0_11], %11 {strides = array<i32>} : memref<2x32xf32, #tpu.memory_space<vmem>>, vector<2x32xf32>,
    } else {
    }
    %c0 = arith.constant 0 : index
    %c0_1 = arith.constant 0 : index
    %3 = vector.load %arg12[%c0, %c0_1] : memref<2x32xf32, #tpu.memory_space<vmem>>, vector<2x32xf32>
    %c0_2 = arith.constant 0 : index
    %c0_3 = arith.constant 0 : index
    %c0_4 = arith.constant 0 : index
    %4 = vector.load %arg2[%c0_2, %c0_3, %c0_4] : memref<2x16x32xf32, #tpu.memory_space<vmem>>, vector<2x16x32xf32>
    %cst = arith.constant dense<0.000000e+00> : vector<2x32xf32>
    %5 = vector.multi_reduction <add>, %4, %cst [1] : vector<2x16x32xf32> to vector<2x32xf32>
    %6 = arith.addf %3, %5 : vector<2x32xf32>
    %c0_5 = arith.constant 0 : index
    %c0_6 = arith.constant 0 : index
    %7 = vector.load %arg12[%c0_5, %c0_6] : memref<2x32xf32, #tpu.memory_space<vmem>>, vector<2x32xf32>
    tpu.vector_store %arg12[%c0_5, %c0_6], %6 {strides = array<i32>} : memref<2x32xf32, #tpu.memory_space<vmem>>, vector<2x32xf32>,
    %c0_i32_7 = arith.constant 0 : i32
    %8 = arith.cmpi eq, %arg1, %c0_i32_7 : i32
    %9 = arith.extui %8 : i1 to i32
    %c0_i32_8 = arith.constant 0 : i32
    %10 = arith.cmpi ne, %9, %c0_i32_8 : i32
    scf.if %10 {
      %c0_9 = arith.constant 0 : index
      %c0_10 = arith.constant 0 : index
      %11 = vector.load %arg12[%c0_9, %c0_10] : memref<2x32xf32, #tpu.memory_space<vmem>>, vector<2x32xf32>
      %cst_11 = arith.constant 6.250000e-02 : f32
      %12 = vector.broadcast %cst_11 : f32 to vector<2x32xf32>
      %13 = arith.mulf %11, %12 : vector<2x32xf32>
      %c0_12 = arith.constant 0 : index
      %c0_13 = arith.constant 0 : index
      %14 = vector.load %arg3[%c0_12, %c0_13] : memref<32x16xf32, #tpu.memory_space<vmem>>, vector<32x16xf32>
      %cst_14 = arith.constant dense<0.000000e+00> : vector<2x16xf32>
      %15 = tpu.matmul %13, %14, %cst_14 {dimension_numbers = #tpu.dot_dimension_numbers<[1], [0], [0], [1], [0, 0, 1, 1], [], []>} : vector<2x32xf32>, vector<32x16xf32>, vector<2x16xf32> -> vector<2x16xf32>
      %c0_15 = arith.constant 0 : index
      %c0_16 = arith.constant 0 : index
      %16 = vector.load %arg4[%c0_15, %c0_16] : memref<1x16xf32, #tpu.memory_space<vmem>>, vector<1x16xf32>
      %17 = vector.broadcast %16 : vector<1x16xf32> to vector<2x16xf32>
      %18 = arith.addf %15, %17 : vector<2x16xf32>
      %cst_17 = arith.constant 0.000000e+00 : f32
      %19 = vector.broadcast %cst_17 : f32 to vector<2x16xf32>
      %20 = arith.maximumf %18, %19 : vector<2x16xf32>
      %c0_18 = arith.constant 0 : index
      %c0_19 = arith.constant 0 : index
      %21 = vector.load %arg5[%c0_18, %c0_19] : memref<16x16xf32, #tpu.memory_space<vmem>>, vector<16x16xf32>
      %cst_20 = arith.constant dense<0.000000e+00> : vector<2x16xf32>
      %22 = tpu.matmul %20, %21, %cst_20 {dimension_numbers = #tpu.dot_dimension_numbers<[1], [0], [0], [1], [0, 0, 1, 1], [], []>} : vector<2x16xf32>, vector<16x16xf32>, vector<2x16xf32> -> vector<2x16xf32>
      %c0_21 = arith.constant 0 : index
      %c0_22 = arith.constant 0 : index
      %23 = vector.load %arg6[%c0_21, %c0_22] : memref<1x16xf32, #tpu.memory_space<vmem>>, vector<1x16xf32>
      %24 = vector.broadcast %23 : vector<1x16xf32> to vector<2x16xf32>
      %25 = arith.addf %22, %24 : vector<2x16xf32>
      %cst_23 = arith.constant 0.000000e+00 : f32
      %26 = vector.broadcast %cst_23 : f32 to vector<2x16xf32>
      %27 = arith.maximumf %25, %26 : vector<2x16xf32>
      %c0_24 = arith.constant 0 : index
      %c0_25 = arith.constant 0 : index
      %28 = vector.load %arg7[%c0_24, %c0_25] : memref<16x16xf32, #tpu.memory_space<vmem>>, vector<16x16xf32>
      %cst_26 = arith.constant dense<0.000000e+00> : vector<2x16xf32>
      %29 = tpu.matmul %27, %28, %cst_26 {dimension_numbers = #tpu.dot_dimension_numbers<[1], [0], [0], [1], [0, 0, 1, 1], [], []>} : vector<2x16xf32>, vector<16x16xf32>, vector<2x16xf32> -> vector<2x16xf32>
      %c0_27 = arith.constant 0 : index
      %c0_28 = arith.constant 0 : index
      %30 = vector.load %arg8[%c0_27, %c0_28] : memref<1x16xf32, #tpu.memory_space<vmem>>, vector<1x16xf32>
      %31 = vector.broadcast %30 : vector<1x16xf32> to vector<2x16xf32>
      %32 = arith.addf %29, %31 : vector<2x16xf32>
      %cst_29 = arith.constant 0.000000e+00 : f32
      %33 = vector.broadcast %cst_29 : f32 to vector<2x16xf32>
      %34 = arith.maximumf %32, %33 : vector<2x16xf32>
      %c0_30 = arith.constant 0 : index
      %c0_31 = arith.constant 0 : index
      %35 = vector.load %arg9[%c0_30, %c0_31] : memref<16x1xf32, #tpu.memory_space<vmem>>, vector<16x1xf32>
      %cst_32 = arith.constant dense<0.000000e+00> : vector<2x1xf32>
      %36 = tpu.matmul %34, %35, %cst_32 {dimension_numbers = #tpu.dot_dimension_numbers<[1], [0], [0], [1], [0, 0, 1, 1], [], []>} : vector<2x16xf32>, vector<16x1xf32>, vector<2x1xf32> -> vector<2x1xf32>
      %c0_33 = arith.constant 0 : index
      %c0_34 = arith.constant 0 : index
      %37 = vector.load %arg10[%c0_33, %c0_34] : memref<1x1xf32, #tpu.memory_space<vmem>>, vector<1x1xf32>
      %38 = vector.broadcast %37 : vector<1x1xf32> to vector<2x1xf32>
      %39 = arith.addf %36, %38 : vector<2x1xf32>
      %c0_35 = arith.constant 0 : index
      %c0_36 = arith.constant 0 : index
      %40 = vector.load %arg11[%c0_35, %c0_36] : memref<2x1xf32, #tpu.memory_space<vmem>>, vector<2x1xf32>
      tpu.vector_store %arg11[%c0_35, %c0_36], %39 {strides = array<i32>} : memref<2x1xf32, #tpu.memory_space<vmem>>, vector<2x1xf32>,
    } else {
    }
    return
  }
  func.func @transform_0(%arg0: i32, %arg1: i32) -> (i32, i32, i32) {
    %c0_i32 = arith.constant 0 : i32
    %c0_i32_0 = arith.constant 0 : i32
    return %arg0, %arg1, %c0_i32 : i32, i32, i32
  }
  func.func @transform_1(%arg0: i32, %arg1: i32) -> (i32, i32) {
    %c0_i32 = arith.constant 0 : i32
    %c0_i32_0 = arith.constant 0 : i32
    %c0_i32_1 = arith.constant 0 : i32
    return %c0_i32, %c0_i32_0 : i32, i32
  }
  func.func @transform_2(%arg0: i32, %arg1: i32) -> (i32, i32) {
    %c0_i32 = arith.constant 0 : i32
    %c0_i32_0 = arith.constant 0 : i32
    %c0_i32_1 = arith.constant 0 : i32
    return %c0_i32, %c0_i32_0 : i32, i32
  }
  func.func @transform_3(%arg0: i32, %arg1: i32) -> (i32, i32) {
    %c0_i32 = arith.constant 0 : i32
    %c0_i32_0 = arith.constant 0 : i32
    %c0_i32_1 = arith.constant 0 : i32
    return %c0_i32, %c0_i32_0 : i32, i32
  }
  func.func @transform_4(%arg0: i32, %arg1: i32) -> (i32, i32) {
    %c0_i32 = arith.constant 0 : i32
    %c0_i32_0 = arith.constant 0 : i32
    %c0_i32_1 = arith.constant 0 : i32
    return %c0_i32, %c0_i32_0 : i32, i32
  }
  func.func @transform_5(%arg0: i32, %arg1: i32) -> (i32, i32) {
    %c0_i32 = arith.constant 0 : i32
    %c0_i32_0 = arith.constant 0 : i32
    %c0_i32_1 = arith.constant 0 : i32
    return %c0_i32, %c0_i32_0 : i32, i32
  }
  func.func @transform_6(%arg0: i32, %arg1: i32) -> (i32, i32) {
    %c0_i32 = arith.constant 0 : i32
    %c0_i32_0 = arith.constant 0 : i32
    %c0_i32_1 = arith.constant 0 : i32
    return %c0_i32, %c0_i32_0 : i32, i32
  }
  func.func @transform_7(%arg0: i32, %arg1: i32) -> (i32, i32) {
    %c0_i32 = arith.constant 0 : i32
    %c0_i32_0 = arith.constant 0 : i32
    %c0_i32_1 = arith.constant 0 : i32
    return %c0_i32, %c0_i32_0 : i32, i32
  }
  func.func @transform_8(%arg0: i32, %arg1: i32) -> (i32, i32) {
    %c0_i32 = arith.constant 0 : i32
    %c0_i32_0 = arith.constant 0 : i32
    %c0_i32_1 = arith.constant 0 : i32
    return %c0_i32, %c0_i32_0 : i32, i32
  }
  func.func @transform_9(%arg0: i32, %arg1: i32) -> (i32, i32) {
    %c0_i32 = arith.constant 0 : i32
    %c0_i32_0 = arith.constant 0 : i32
    return %arg0, %c0_i32 : i32, i32
  }
}

</mosaic_0001>

<llo_original>
// kernel: tpu_custom_call.1
$region0: #{tpu_custom_call.1}
  #allocation0 [shape = 'u32[]', space=smem, size = 0x4, offset = 0x4, fixed_abs, tag = 'smem constant byte address 0x4 - core index']
  #allocation1 [shape = 'u32[144,128]{1,0:T(1,128)}', space=vmem, size = 0x12000, scoped, tag = 'internal scratch']
  #allocation2 [shape = 'f32[2,32]{1,0:T(2,128)}', space=vmem, size = 0x400, scoped, tag = 'scratch operand']
  #allocation3 [shape = 'f32[1,1]{1,0:T(1,128)S(1)}', space=vmem, size = 0x200, scoped, tag = 'scoped memory for tpu_custom_call.1']
  %s0 = inlined_call_operand.vmem [shape: f32[2,16,32], index: 0, kind: input, shape index: {}]
  %s1 = inlined_call_operand.vmem [shape: f32[32,16], index: 1, kind: input, shape index: {}]
  %s2 = inlined_call_operand.hbm [shape: f32[1,16], index: 2, kind: input, shape index: {}]
  %s3 = inlined_call_operand.vmem [shape: f32[16,16], index: 3, kind: input, shape index: {}]
  %s4 = inlined_call_operand.vmem [shape: f32[1,16], index: 4, kind: input, shape index: {}]
  %s5 = inlined_call_operand.vmem [shape: f32[16,16], index: 5, kind: input, shape index: {}]
  %s6 = inlined_call_operand.vmem [shape: f32[1,16], index: 6, kind: input, shape index: {}]
  %s7 = inlined_call_operand.vmem [shape: f32[16,1], index: 7, kind: input, shape index: {}]
  %s8 = inlined_call_operand.<no memory space> [shape: f32[1,1], index: 8, kind: input, shape index: {}]
  %s9 = inlined_call_operand.vmem [shape: f32[2,1], index: 9, kind: output, shape index: {}]
  %s10 = sld [smem:[#allocation0]]
  $region58: #{tpu_custom_call.1} parent=0
    _
  %s12 = ssub.s32 1, %s10
  %s13 = scalar_select 0, %s12, %s10
  %v14 = vstv %s8
  %15 = vst [vmem:[#allocation3] sm:$0x1] %v14
  $region1: #{tpu_custom_call.1} parent=0
    #allocation4 [shape = 'u8[512]{0}', space=vmem, size = 0x400, scoped, tag = 'input window, operand 2, single buffered']
    #allocation5 [shape = 's32[1]{0}', space=sflag, size = 0x4, scoped, tag = 'scoped memory for tpu_custom_call.1']
    %16 = vsyncpa [#allocation5], 0
    // Predicated region
    $region2: #{tpu_custom_call.1} parent=1 // pred_check
      _
    $region3: #{tpu_custom_call.1} parent=1 // pred_check_branch
      %18 = sbr.rel (0) target = $region5
    $region4: #{tpu_custom_call.1} parent=1 // pred_region
      _
    $region5: #{tpu_custom_call.1} parent=1 // pred_fallthru
      _
    // Predicated region
    $region6: #{tpu_custom_call.1} parent=1 // pred_check
      _
    $region7: #{tpu_custom_call.1} parent=1 // pred_check_branch
      %20 = sbr.rel (0) target = $region9
    $region8: #{tpu_custom_call.1} parent=1 // pred_region
      _
    $region9: #{tpu_custom_call.1} parent=1 // pred_fallthru
      _
    // Predicated region
    $region10: #{tpu_custom_call.1} parent=1 // pred_check
      _
    $region11: #{tpu_custom_call.1} parent=1 // pred_check_branch
      %22 = sbr.rel (0) target = $region13
    $region12: #{tpu_custom_call.1} parent=1 // pred_region
      %s24 = ssub.s32 16, 16
      %25 = vsyncadd [#allocation5], %s24
      %s27 = sshll.u32 [#allocation4], 4
      %s28 = int_to_ptr.vmem [resolvable:$true] %s27
      %30 = dma.hbm_to_vmem [thread:$0]  %s2, 16, %s28, [#allocation5]
    $region13: #{tpu_custom_call.1} parent=1 // pred_fallthru
      _
    // Predicated region
    $region14: #{tpu_custom_call.1} parent=1 // pred_check
      _
    $region15: #{tpu_custom_call.1} parent=1 // pred_check_branch
      %32 = sbr.rel (0) target = $region17
    $region16: #{tpu_custom_call.1} parent=1 // pred_region
      _
    $region17: #{tpu_custom_call.1} parent=1 // pred_fallthru
      _
    // Predicated region
    $region18: #{tpu_custom_call.1} parent=1 // pred_check
      _
    $region19: #{tpu_custom_call.1} parent=1 // pred_check_branch
      %34 = sbr.rel (0) target = $region21
    $region20: #{tpu_custom_call.1} parent=1 // pred_region
      _
    $region21: #{tpu_custom_call.1} parent=1 // pred_fallthru
      _
    // Predicated region
    $region22: #{tpu_custom_call.1} parent=1 // pred_check
      _
    $region23: #{tpu_custom_call.1} parent=1 // pred_check_branch
      %36 = sbr.rel (0) target = $region25
    $region24: #{tpu_custom_call.1} parent=1 // pred_region
      _
    $region25: #{tpu_custom_call.1} parent=1 // pred_fallthru
      _
    // Predicated region
    $region26: #{tpu_custom_call.1} parent=1 // pred_check
      _
    $region27: #{tpu_custom_call.1} parent=1 // pred_check_branch
      %38 = sbr.rel (0) target = $region29
    $region28: #{tpu_custom_call.1} parent=1 // pred_region
      _
    $region29: #{tpu_custom_call.1} parent=1 // pred_fallthru
      _
    // Predicated region
    $region30: #{tpu_custom_call.1} parent=1 // pred_check
      _
    $region31: #{tpu_custom_call.1} parent=1 // pred_check_branch
      %40 = sbr.rel (0) target = $region33
    $region32: #{tpu_custom_call.1} parent=1 // pred_region
      _
    $region33: #{tpu_custom_call.1} parent=1 // pred_fallthru
      _
    // Predicated region
    $region34: #{tpu_custom_call.1} parent=1 // pred_check
      _
    $region35: #{tpu_custom_call.1} parent=1 // pred_check_branch
      %42 = sbr.rel (0) target = $region37
    $region36: #{tpu_custom_call.1} parent=1 // pred_region
      _
    $region37: #{tpu_custom_call.1} parent=1 // pred_fallthru
      _
    // Predicated region
    $region38: #{tpu_custom_call.1} parent=1 // pred_check
      _
    $region39: #{tpu_custom_call.1} parent=1 // pred_check_branch
      %44 = sbr.rel (0) target = $region41
    $region40: #{tpu_custom_call.1} parent=1 // pred_region
      %45 = dma.done [#allocation5], 16
    $region41: #{tpu_custom_call.1} parent=1 // pred_fallthru
      _
    %p46 = scmp.eq.s32.totalorder 0, 0
    // Predicated region
    $region42: #{tpu_custom_call.1} parent=1 // pred_check
      %p47 = pneg %p46
    $region43: #{tpu_custom_call.1} parent=1 // pred_check_branch
      %49 = sbr.rel (%p47) target = $region45
    $region44: #{tpu_custom_call.1} parent=1 // pred_region
      %vm50 = vcmask 254976
      %51 = vst.msk [vmem:[#allocation2] sm:$0x3] %vm50, 0.0
    $region45: #{tpu_custom_call.1} parent=1 // pred_fallthru
      _
    %v52 = vld [vmem:[#allocation2] sm:$0x3]
    %v53 = vld [vmem:[%s0] sm:$0xff]
    %v54 = vld [vmem:[%s0 + $0x8] sm:$0xff]
    %v55 = vld [vmem:[%s0 + $0x10] sm:$0xff]
    %v56 = vld [vmem:[%s0 + $0x18] sm:$0xff]
    %vm57 = vcmask 261120
    %v58 = vsel %vm57, %v53, 0.0
    %v59 = vsel %vm57, %v54, 0.0
    %v60 = vadd.f32 %v58, %v59
    %v61 = vrot.slane %v60, 4
    %v62 = vadd.f32 %v60, %v61
    %v63 = vrot.slane %v62, 2
    %v64 = vadd.f32 %v62, %v63
    %v65 = vrot.slane %v64, 1
    %v66 = vadd.f32 %v64, %v65
    %v67 = vsel %vm57, %v55, 0.0
    %v68 = vsel %vm57, %v56, 0.0
    %v69 = vadd.f32 %v67, %v68
    %v70 = vrot.slane %v69, 4
    %v71 = vadd.f32 %v69, %v70
    %v72 = vrot.slane %v71, 2
    %v73 = vadd.f32 %v71, %v72
    %v74 = vrot.slane %v73, 1
    %v75 = vadd.f32 %v73, %v74
    %vm78 = vcmask 1041409
    %v79 = vsel %vm78, %v75, %v66
    %v81 = vadd.f32 %v52, %v79
    %vm82 = vcmask 254976
    %83 = vst.msk [vmem:[#allocation2] sm:$0x3] %vm82, %v81
    // Predicated region
    $region46: #{tpu_custom_call.1} parent=1 // pred_check
      %p84 = pneg %p46
    $region47: #{tpu_custom_call.1} parent=1 // pred_check_branch
      %86 = sbr.rel (%p84) target = $region49
    $region48: #{tpu_custom_call.1} parent=1 // pred_region
      %v87 = vld [vmem:[#allocation2] sm:$0x3]
      %v88 = vmul.f32 %v87, 0.0625
      %v89 = vld [vmem:[%s1] sm:$0xff]
      %v90 = vld [vmem:[%s1 + $0x8] sm:$0xff]
      %v91 = vld [vmem:[%s1 + $0x10] sm:$0xff]
      %v92 = vld [vmem:[%s1 + $0x18] sm:$0xff]
      %v93 = vld [vmem:[#allocation4] sm:$0x1]
      %v95 = vlaneseq
      %v96 = vshrl.u32 %v95, 7
      %v97 = vsub.s32 0, %v96
      %v98 = vrot.slane %v93, %v97
      %v101 = vsel %vm57, %v88, 0
      %103 = vmatprep.subr.mxu0 0.0
      %104 = vmatpush1.msra.mxu0 %v89
      %105 = vmatprep.subr.mxu0 0.0
      %106 = vmatpush1.msra.mxu0 %v90
      %107 = vmatprep.subr.mxu0 0.0
      %108 = vmatpush1.msra.mxu0 %v91
      %109 = vmatprep.subr.mxu0 0.0
      %110 = vmatpush1.msra.mxu0 %v92
      %111 = vmatprep.subr.mxu0 0.0
      %112 = vmatpush1.msra.mxu0 0.0
      %113 = vmatprep.subr.mxu0 0.0
      %114 = vmatpush1.msra.mxu0 0.0
      %115 = vmatprep.subr.mxu0 0.0
      %116 = vmatpush1.msra.mxu0 0.0
      %117 = vmatprep.subr.mxu0 0.0
      %118 = vmatpush1.msra.mxu0 0.0
      %119 = vmatprep.subr.mxu0 0.0
      %120 = vmatpush1.msra.mxu0 0.0
      %121 = vmatprep.subr.mxu0 0.0
      %122 = vmatpush1.msra.mxu0 0.0
      %123 = vmatprep.subr.mxu0 0.0
      %124 = vmatpush1.msra.mxu0 0.0
      %125 = vmatprep.subr.mxu0 0.0
      %126 = vmatpush1.msra.mxu0 0.0
      %127 = vmatprep.subr.mxu0 0.0
      %128 = vmatpush1.msra.mxu0 0.0
      %129 = vmatprep.subr.mxu0 0.0
      %130 = vmatpush1.msra.mxu0 0.0
      %131 = vmatprep.subr.mxu0 0.0
      %132 = vmatpush1.msra.mxu0 0.0
      %133 = vmatprep.subr.mxu0 0.0
      %134 = vmatpush1.msra.mxu0 0.0
      %135 = vmatprep.subr.mxu0 0.0
      %136 = vmatpush1.msra.mxu0 0.0
      %137 = vmatprep.subr.mxu0 0.0
      %138 = vmatpush1.msra.mxu0 0.0
      %139 = vmatprep.subr.mxu0 0.0
      %140 = vmatpush1.msra.mxu0 0.0
      %141 = vmatprep.subr.mxu0 0.0
      %142 = vmatpush1.msra.mxu0 0.0
      %143 = vmatprep.subr.mxu0 0.0
      %144 = vmatpush1.msra.mxu0 0.0
      %145 = vmatprep.subr.mxu0 0.0
      %146 = vmatpush1.msra.mxu0 0.0
      %147 = vmatprep.subr.mxu0 0.0
      %148 = vmatpush1.msra.mxu0 0.0
      %149 = vmatprep.subr.mxu0 0.0
      %150 = vmatpush1.msra.mxu0 0.0
      %151 = vmatprep.subr.mxu0 0.0
      %152 = vmatpush1.msra.mxu0 0.0
      %153 = vmatprep.subr.mxu0 0.0
      %154 = vmatpush1.msra.mxu0 0.0
      %155 = vmatprep.subr.mxu0 0.0
      %156 = vmatpush1.msra.mxu0 0.0
      %157 = vmatprep.subr.mxu0 0.0
      %158 = vmatpush1.msra.mxu0 0.0
      %159 = vmatprep.subr.mxu0 0.0
      %160 = vmatpush1.msra.mxu0 0.0
      %161 = vmatprep.subr.mxu0 0.0
      %162 = vmatpush1.msra.mxu0 0.0
      %163 = vmatprep.subr.mxu0 0.0
      %164 = vmatpush1.msra.mxu0 0.0
      %165 = vmatprep.subr.mxu0 0.0
      %166 = vmatpush1.msra.mxu0 0.0
      %167 = vmatprep.mubr.f32.mxu0 0.0
      %168 = vmatmul.mubr.f32.gmra.mrb[0].mxu0 %v101
      %v169 = vpop.f32.mrb[0].mxu0
      %v170 = vadd.f32 %v98, %v169
      %v171 = vpop.f32.mrb[0].mxu0
      %172 = vdwg.mxu0
      %v173 = vmax.f32 %v170, 0.0
      %v174 = vld [vmem:[%s3] sm:$0xff]
      %v175 = vld [vmem:[%s3 + $0x8] sm:$0xff]
      %v176 = vld [vmem:[%s4] sm:$0x1]
      %v178 = vlaneseq
      %v179 = vshrl.u32 %v178, 7
      %v180 = vsub.s32 0, %v179
      %v181 = vrot.slane %v176, %v180
      %vm183 = vcmask 130048
      %v185 = vsel %vm183, %v173, 0
      %187 = vmatprep.subr.mxu0 0.0
      %188 = vmatpush1.msra.mxu0 %v174
      %189 = vmatprep.subr.mxu0 0.0
      %190 = vmatpush1.msra.mxu0 %v175
      %191 = vmatprep.subr.mxu0 0.0
      %192 = vmatpush1.msra.mxu0 0.0
      %193 = vmatprep.subr.mxu0 0.0
      %194 = vmatpush1.msra.mxu0 0.0
      %195 = vmatprep.subr.mxu0 0.0
      %196 = vmatpush1.msra.mxu0 0.0
      %197 = vmatprep.subr.mxu0 0.0
      %198 = vmatpush1.msra.mxu0 0.0
      %199 = vmatprep.subr.mxu0 0.0
      %200 = vmatpush1.msra.mxu0 0.0
      %201 = vmatprep.subr.mxu0 0.0
      %202 = vmatpush1.msra.mxu0 0.0
      %203 = vmatprep.subr.mxu0 0.0
      %204 = vmatpush1.msra.mxu0 0.0
      %205 = vmatprep.subr.mxu0 0.0
      %206 = vmatpush1.msra.mxu0 0.0
      %207 = vmatprep.subr.mxu0 0.0
      %208 = vmatpush1.msra.mxu0 0.0
      %209 = vmatprep.subr.mxu0 0.0
      %210 = vmatpush1.msra.mxu0 0.0
      %211 = vmatprep.subr.mxu0 0.0
      %212 = vmatpush1.msra.mxu0 0.0
      %213 = vmatprep.subr.mxu0 0.0
      %214 = vmatpush1.msra.mxu0 0.0
      %215 = vmatprep.subr.mxu0 0.0
      %216 = vmatpush1.msra.mxu0 0.0
      %217 = vmatprep.subr.mxu0 0.0
      %218 = vmatpush1.msra.mxu0 0.0
      %219 = vmatprep.subr.mxu0 0.0
      %220 = vmatpush1.msra.mxu0 0.0
      %221 = vmatprep.subr.mxu0 0.0
      %222 = vmatpush1.msra.mxu0 0.0
      %223 = vmatprep.subr.mxu0 0.0
      %224 = vmatpush1.msra.mxu0 0.0
      %225 = vmatprep.subr.mxu0 0.0
      %226 = vmatpush1.msra.mxu0 0.0
      %227 = vmatprep.subr.mxu0 0.0
      %228 = vmatpush1.msra.mxu0 0.0
      %229 = vmatprep.subr.mxu0 0.0
      %230 = vmatpush1.msra.mxu0 0.0
      %231 = vmatprep.subr.mxu0 0.0
      %232 = vmatpush1.msra.mxu0 0.0
      %233 = vmatprep.subr.mxu0 0.0
      %234 = vmatpush1.msra.mxu0 0.0
      %235 = vmatprep.subr.mxu0 0.0
      %236 = vmatpush1.msra.mxu0 0.0
      %237 = vmatprep.subr.mxu0 0.0
      %238 = vmatpush1.msra.mxu0 0.0
      %239 = vmatprep.subr.mxu0 0.0
      %240 = vmatpush1.msra.mxu0 0.0
      %241 = vmatprep.subr.mxu0 0.0
      %242 = vmatpush1.msra.mxu0 0.0
      %243 = vmatprep.subr.mxu0 0.0
      %244 = vmatpush1.msra.mxu0 0.0
      %245 = vmatprep.subr.mxu0 0.0
      %246 = vmatpush1.msra.mxu0 0.0
      %247 = vmatprep.subr.mxu0 0.0
      %248 = vmatpush1.msra.mxu0 0.0
      %249 = vmatprep.subr.mxu0 0.0
      %250 = vmatpush1.msra.mxu0 0.0
      %251 = vmatprep.mubr.f32.mxu0 0.0
      %252 = vmatmul.mubr.f32.gmra.mrb[0].mxu0 %v185
      %v253 = vpop.f32.mrb[0].mxu0
      %v254 = vadd.f32 %v181, %v253
      %v255 = vpop.f32.mrb[0].mxu0
      %256 = vdwg.mxu0
      %v257 = vmax.f32 %v254, 0.0
      %v258 = vld [vmem:[%s5] sm:$0xff]
      %v259 = vld [vmem:[%s5 + $0x8] sm:$0xff]
      %v260 = vld [vmem:[%s6] sm:$0x1]
      %v262 = vlaneseq
      %v263 = vshrl.u32 %v262, 7
      %v264 = vsub.s32 0, %v263
      %v265 = vrot.slane %v260, %v264
      %v268 = vsel %vm183, %v257, 0
      %270 = vmatprep.subr.mxu0 0.0
      %271 = vmatpush1.msra.mxu0 %v258
      %272 = vmatprep.subr.mxu0 0.0
      %273 = vmatpush1.msra.mxu0 %v259
      %274 = vmatprep.subr.mxu0 0.0
      %275 = vmatpush1.msra.mxu0 0.0
      %276 = vmatprep.subr.mxu0 0.0
      %277 = vmatpush1.msra.mxu0 0.0
      %278 = vmatprep.subr.mxu0 0.0
      %279 = vmatpush1.msra.mxu0 0.0
      %280 = vmatprep.subr.mxu0 0.0
      %281 = vmatpush1.msra.mxu0 0.0
      %282 = vmatprep.subr.mxu0 0.0
      %283 = vmatpush1.msra.mxu0 0.0
      %284 = vmatprep.subr.mxu0 0.0
      %285 = vmatpush1.msra.mxu0 0.0
      %286 = vmatprep.subr.mxu0 0.0
      %287 = vmatpush1.msra.mxu0 0.0
      %288 = vmatprep.subr.mxu0 0.0
      %289 = vmatpush1.msra.mxu0 0.0
      %290 = vmatprep.subr.mxu0 0.0
      %291 = vmatpush1.msra.mxu0 0.0
      %292 = vmatprep.subr.mxu0 0.0
      %293 = vmatpush1.msra.mxu0 0.0
      %294 = vmatprep.subr.mxu0 0.0
      %295 = vmatpush1.msra.mxu0 0.0
      %296 = vmatprep.subr.mxu0 0.0
      %297 = vmatpush1.msra.mxu0 0.0
      %298 = vmatprep.subr.mxu0 0.0
      %299 = vmatpush1.msra.mxu0 0.0
      %300 = vmatprep.subr.mxu0 0.0
      %301 = vmatpush1.msra.mxu0 0.0
      %302 = vmatprep.subr.mxu0 0.0
      %303 = vmatpush1.msra.mxu0 0.0
      %304 = vmatprep.subr.mxu0 0.0
      %305 = vmatpush1.msra.mxu0 0.0
      %306 = vmatprep.subr.mxu0 0.0
      %307 = vmatpush1.msra.mxu0 0.0
      %308 = vmatprep.subr.mxu0 0.0
      %309 = vmatpush1.msra.mxu0 0.0
      %310 = vmatprep.subr.mxu0 0.0
      %311 = vmatpush1.msra.mxu0 0.0
      %312 = vmatprep.subr.mxu0 0.0
      %313 = vmatpush1.msra.mxu0 0.0
      %314 = vmatprep.subr.mxu0 0.0
      %315 = vmatpush1.msra.mxu0 0.0
      %316 = vmatprep.subr.mxu0 0.0
      %317 = vmatpush1.msra.mxu0 0.0
      %318 = vmatprep.subr.mxu0 0.0
      %319 = vmatpush1.msra.mxu0 0.0
      %320 = vmatprep.subr.mxu0 0.0
      %321 = vmatpush1.msra.mxu0 0.0
      %322 = vmatprep.subr.mxu0 0.0
      %323 = vmatpush1.msra.mxu0 0.0
      %324 = vmatprep.subr.mxu0 0.0
      %325 = vmatpush1.msra.mxu0 0.0
      %326 = vmatprep.subr.mxu0 0.0
      %327 = vmatpush1.msra.mxu0 0.0
      %328 = vmatprep.subr.mxu0 0.0
      %329 = vmatpush1.msra.mxu0 0.0
      %330 = vmatprep.subr.mxu0 0.0
      %331 = vmatpush1.msra.mxu0 0.0
      %332 = vmatprep.subr.mxu0 0.0
      %333 = vmatpush1.msra.mxu0 0.0
      %334 = vmatprep.mubr.f32.mxu0 0.0
      %335 = vmatmul.mubr.f32.gmra.mrb[0].mxu0 %v268
      %v336 = vpop.f32.mrb[0].mxu0
      %v337 = vadd.f32 %v265, %v336
      %v338 = vpop.f32.mrb[0].mxu0
      %339 = vdwg.mxu0
      %v340 = vmax.f32 %v337, 0.0
      %v341 = vld [vmem:[%s7] sm:$0xff]
      %v342 = vld [vmem:[%s7 + $0x8] sm:$0xff]
      %v343 = vld [vmem:[#allocation3] sm:$0x1]
      %v345 = vlaneseq
      %v346 = vshrl.u32 %v345, 7
      %v347 = vsub.s32 0, %v346
      %v348 = vrot.slane %v343, %v347
      %v351 = vsel %vm183, %v340, 0
      %353 = vmatprep.subr.mxu0 0.0
      %354 = vmatpush1.msra.mxu0 %v341
      %355 = vmatprep.subr.mxu0 0.0
      %356 = vmatpush1.msra.mxu0 %v342
      %357 = vmatprep.subr.mxu0 0.0
      %358 = vmatpush1.msra.mxu0 0.0
      %359 = vmatprep.subr.mxu0 0.0
      %360 = vmatpush1.msra.mxu0 0.0
      %361 = vmatprep.subr.mxu0 0.0
      %362 = vmatpush1.msra.mxu0 0.0
      %363 = vmatprep.subr.mxu0 0.0
      %364 = vmatpush1.msra.mxu0 0.0
      %365 = vmatprep.subr.mxu0 0.0
      %366 = vmatpush1.msra.mxu0 0.0
      %367 = vmatprep.subr.mxu0 0.0
      %368 = vmatpush1.msra.mxu0 0.0
      %369 = vmatprep.subr.mxu0 0.0
      %370 = vmatpush1.msra.mxu0 0.0
      %371 = vmatprep.subr.mxu0 0.0
      %372 = vmatpush1.msra.mxu0 0.0
      %373 = vmatprep.subr.mxu0 0.0
      %374 = vmatpush1.msra.mxu0 0.0
      %375 = vmatprep.subr.mxu0 0.0
      %376 = vmatpush1.msra.mxu0 0.0
      %377 = vmatprep.subr.mxu0 0.0
      %378 = vmatpush1.msra.mxu0 0.0
      %379 = vmatprep.subr.mxu0 0.0
      %380 = vmatpush1.msra.mxu0 0.0
      %381 = vmatprep.subr.mxu0 0.0
      %382 = vmatpush1.msra.mxu0 0.0
      %383 = vmatprep.subr.mxu0 0.0
      %384 = vmatpush1.msra.mxu0 0.0
      %385 = vmatprep.subr.mxu0 0.0
      %386 = vmatpush1.msra.mxu0 0.0
      %387 = vmatprep.subr.mxu0 0.0
      %388 = vmatpush1.msra.mxu0 0.0
      %389 = vmatprep.subr.mxu0 0.0
      %390 = vmatpush1.msra.mxu0 0.0
      %391 = vmatprep.subr.mxu0 0.0
      %392 = vmatpush1.msra.mxu0 0.0
      %393 = vmatprep.subr.mxu0 0.0
      %394 = vmatpush1.msra.mxu0 0.0
      %395 = vmatprep.subr.mxu0 0.0
      %396 = vmatpush1.msra.mxu0 0.0
      %397 = vmatprep.subr.mxu0 0.0
      %398 = vmatpush1.msra.mxu0 0.0
      %399 = vmatprep.subr.mxu0 0.0
      %400 = vmatpush1.msra.mxu0 0.0
      %401 = vmatprep.subr.mxu0 0.0
      %402 = vmatpush1.msra.mxu0 0.0
      %403 = vmatprep.subr.mxu0 0.0
      %404 = vmatpush1.msra.mxu0 0.0
      %405 = vmatprep.subr.mxu0 0.0
      %406 = vmatpush1.msra.mxu0 0.0
      %407 = vmatprep.subr.mxu0 0.0
      %408 = vmatpush1.msra.mxu0 0.0
      %409 = vmatprep.subr.mxu0 0.0
      %410 = vmatpush1.msra.mxu0 0.0
      %411 = vmatprep.subr.mxu0 0.0
      %412 = vmatpush1.msra.mxu0 0.0
      %413 = vmatprep.subr.mxu0 0.0
      %414 = vmatpush1.msra.mxu0 0.0
      %415 = vmatprep.subr.mxu0 0.0
      %416 = vmatpush1.msra.mxu0 0.0
      %417 = vmatprep.mubr.f32.mxu0 0.0
      %418 = vmatmul.mubr.f32.gmra.mrb[0].mxu0 %v351
      %v419 = vpop.f32.mrb[0].mxu0
      %v420 = vadd.f32 %v348, %v419
      %v421 = vpop.f32.mrb[0].mxu0
      %422 = vdwg.mxu0
      %vm423 = vcmask 1024
      %424 = vst.msk [vmem:[%s9] sm:$0x3] %vm423, %v420
    $region49: #{tpu_custom_call.1} parent=1 // pred_fallthru
      _
    // Predicated region
    $region50: #{tpu_custom_call.1} parent=1 // pred_check
      _
    $region51: #{tpu_custom_call.1} parent=1 // pred_check_branch
      %426 = sbr.rel (0) target = $region53
    $region52: #{tpu_custom_call.1} parent=1 // pred_region
      _
    $region53: #{tpu_custom_call.1} parent=1 // pred_fallthru
      _
    // Predicated region
    $region54: #{tpu_custom_call.1} parent=1 // pred_check
      _
    $region55: #{tpu_custom_call.1} parent=1 // pred_check_branch
      %428 = sbr.rel (0) target = $region57
    $region56: #{tpu_custom_call.1} parent=1 // pred_region
      _
    $region57: #{tpu_custom_call.1} parent=1 // pred_fallthru
      _
    %429 = vsyncpa [#allocation5], 1

</llo_original>
